<compile_context>
chip_gen: v7x
topology: tpu7x:2x2x1
jax: 0.10.0
libtpu: 0.0.40
codegen_flags: <defaults>
</compile_context>

<pallas_src>
import functools

import jax
import jax.numpy as jnp
from jax.experimental import pallas as pl
from jax.experimental.pallas import tpu as pltpu


def coupling_kernel(z_ref, mask_ref, ws_ref, wt_ref, bs_ref, bt_ref,
                    sfac_ref, inv_sfac_ref, logpx_ref,
                    zout_ref, logpx_out_ref, acc_ref, *, reverse):
    j = pl.program_id(1)
    nj = pl.num_programs(1)

    # ---- log-det accumulator init (first voxel tile of this batch element) --
    @pl.when(j == 0)
    def _():
        acc_ref[...] = jnp.zeros_like(acc_ref)

    z = z_ref[0]                               # (CP, TS) f32
    m = mask_ref[...].astype(jnp.float32)      # (CP, TS) bf16 -> f32 (exact 0/1)
    z_in = z * m

    # "network": pointwise conv C -> 2C, split into the s-head and t-head so
    # no sublane-misaligned slice of a fused (2C, TS) result is needed.
    s = jnp.dot(ws_ref[...], z_in, preferred_element_type=jnp.float32) + bs_ref[...]
    t = jnp.dot(wt_ref[...], z_in, preferred_element_type=jnp.float32) + bt_ref[...]

    # tanh rescale: s = tanh(s / s_fac) * s_fac, with the divide replaced by a
    # multiply with the precomputed reciprocal.
    s = jnp.tanh(s * inv_sfac_ref[...]) * sfac_ref[...]

    om = 1.0 - m
    s = s * om
    t = t * om

    if not reverse:
        zout_ref[0] = z * jnp.exp(s) + t
    else:
        zout_ref[0] = (z - t) * jnp.exp(-s)

    # ---- accumulate log-det contribution of this tile ----------------------
    acc_ref[...] += jnp.sum(s, keepdims=True)

    # ---- finalize: single per-batch-element write ---------------------------
    @pl.when(j == nj - 1)
    def _():
        logpx_out_ref[0] = logpx_ref[0] + acc_ref[...]


def _pick_tile(sp, max_ts=2048):
    """Largest lane-aligned tile (multiple of 128) dividing sp, capped at max_ts."""
    if sp <= max_ts:
        return sp
    for ts in range(max_ts, 127, -128):
        if sp % ts == 0:
            return ts
    return sp  # fallback: whole axis as one block (legal: block == full dim)


def coupling_layer(z, logpx, mask, w, b, scaling_factor, reverse=False,
                   max_tile=2048):
    """z: (N, C, D, H, W) f32, logpx: (N,) f32, mask: (C, D, H, W) in {0,1},
       w: (2C, C), b: (2C,), scaling_factor: (C,)."""
    N, C, D, H, Wd = z.shape
    S = D * H * Wd

    # Sublane densification: view (C, S) as (C*k, S/k) so VPU/EUP vregs are
    # full even for C < 8.  Pure row-major reshape; weights expand via kron.
    if C < 8 and 8 % C == 0 and S % (8 // C) == 0:
        k = 8 // C
    else:
        k = 1
    CP, SP = C * k, S // k

    zf = z.reshape(N, CP, SP)
    maskf = mask.reshape(CP, SP).astype(jnp.bfloat16)

    w_s, w_t = w[:C], w[C:]
    b_s, b_t = b[:C], b[C:]
    sf = scaling_factor
    if k > 1:
        eye = jnp.eye(k, dtype=w.dtype)
        w_s = jnp.kron(w_s, eye)
        w_t = jnp.kron(w_t, eye)
        b_s = jnp.repeat(b_s, k)
        b_t = jnp.repeat(b_t, k)
        sf = jnp.repeat(sf, k)

    sfac = jnp.exp(sf).reshape(CP, 1)
    inv_sfac = jnp.exp(-sf).reshape(CP, 1)
    b_s = b_s.reshape(CP, 1)
    b_t = b_t.reshape(CP, 1)

    TS = _pick_tile(SP, max_tile)
    J = SP // TS

    logpx3 = logpx.astype(jnp.float32).reshape(N, 1, 1)

    kernel = functools.partial(coupling_kernel, reverse=reverse)

    z_out, logpx_out = pl.pallas_call(
        kernel,
        out_shape=(
            jax.ShapeDtypeStruct((N, CP, SP), z.dtype),
            jax.ShapeDtypeStruct((N, 1, 1), jnp.float32),
        ),
        grid=(N, J),
        in_specs=[
            pl.BlockSpec((1, CP, TS), lambda n, j: (n, 0, j)),   # z tile
            pl.BlockSpec((CP, TS),    lambda n, j: (0, j)),      # mask tile (bf16)
            pl.BlockSpec((CP, CP),    lambda n, j: (0, 0)),      # w_s (resident)
            pl.BlockSpec((CP, CP),    lambda n, j: (0, 0)),      # w_t (resident)
            pl.BlockSpec((CP, 1),     lambda n, j: (0, 0)),      # b_s
            pl.BlockSpec((CP, 1),     lambda n, j: (0, 0)),      # b_t
            pl.BlockSpec((CP, 1),     lambda n, j: (0, 0)),      # exp(scaling)
            pl.BlockSpec((CP, 1),     lambda n, j: (0, 0)),      # exp(-scaling)
            pl.BlockSpec((1, 1, 1),   lambda n, j: (n, 0, 0)),   # logpx (per-n)
        ],
        out_specs=(
            pl.BlockSpec((1, CP, TS), lambda n, j: (n, 0, j)),   # z out tile
            pl.BlockSpec((1, 1, 1),   lambda n, j: (n, 0, 0)),   # logpx out (per-n)
        ),
        scratch_shapes=[pltpu.VMEM((1, 1), jnp.float32)],        # log-det accum
        compiler_params=pltpu.CompilerParams(
            dimension_semantics=("parallel", "arbitrary")),
    )(zf, maskf, w_s, w_t, b_s, b_t, sfac, inv_sfac, logpx3)

    return z_out.reshape(N, C, D, H, Wd), logpx_out.reshape(N)


def coupling_layer_ref(z, logpx, mask, w, b, scaling_factor, reverse=False):
    """Pure-JAX reference with PyTorch semantics (NCDHW)."""
    N, C, D, H, Wd = z.shape
    z_in = z * mask                                           # mask broadcasts over N
    zf = z_in.reshape(N, C, -1)
    nn_out = jnp.einsum('oc,ncs->nos', w, zf) + b[None, :, None]
    nn_out = nn_out.reshape(N, 2 * C, D, H, Wd)
    s, t = nn_out[:, :C], nn_out[:, C:]
    s_fac = jnp.exp(scaling_factor).reshape(1, -1, 1, 1, 1)
    s = jnp.tanh(s / s_fac) * s_fac
    s = s * (1.0 - mask)
    t = t * (1.0 - mask)
    if not reverse:
        z = z * jnp.exp(s) + t
    else:
        z = (z - t) * jnp.exp(-s)
    return z, logpx + s.sum(axis=(1, 2, 3, 4))


if __name__ == "__main__":
    N, C, D, H, W = 2, 4, 8, 8, 8

    key = jax.random.PRNGKey(0)
    k_z, k_lp, k_w, k_b, k_sf = jax.random.split(key, 5)

    z = jax.random.normal(k_z, (N, C, D, H, W), dtype=jnp.float32)
    logpx = jax.random.normal(k_lp, (N,), dtype=jnp.float32)

    # Deterministic synthetic parameters (network = 1x1x1 conv C -> 2C).
    w = 0.1 * jax.random.normal(k_w, (2 * C, C), dtype=jnp.float32)
    b = 0.05 * jax.random.normal(k_b, (2 * C,), dtype=jnp.float32)
    scaling_factor = 0.1 * jax.random.normal(k_sf, (C,), dtype=jnp.float32)

    # Checkerboard binary mask over voxels, shared across channels.
    d_idx = jnp.arange(D).reshape(D, 1, 1)
    h_idx = jnp.arange(H).reshape(1, H, 1)
    w_idx = jnp.arange(W).reshape(1, 1, W)
    checker = ((d_idx + h_idx + w_idx) % 2).astype(jnp.float32)   # (D, H, W)
    mask = jnp.broadcast_to(checker, (C, D, H, W))

    # Forward
    z_out, logpx_out = coupling_layer(z, logpx, mask, w, b, scaling_factor)
    jax.block_until_ready((z_out, logpx_out))
    z_ref, logpx_ref = coupling_layer_ref(z, logpx, mask, w, b, scaling_factor)
    assert jnp.allclose(z_out, z_ref, rtol=1e-5, atol=1e-5), "z mismatch (fwd)"
    assert jnp.allclose(logpx_out, logpx_ref, rtol=1e-5, atol=1e-5), "logpx mismatch (fwd)"

    # Reverse
    z_rev, logpx_rev = coupling_layer(z, logpx, mask, w, b, scaling_factor, reverse=True)
    jax.block_until_ready((z_rev, logpx_rev))
    z_ref_r, logpx_ref_r = coupling_layer_ref(z, logpx, mask, w, b, scaling_factor, reverse=True)
    assert jnp.allclose(z_rev, z_ref_r, rtol=1e-5, atol=1e-5), "z mismatch (rev)"
    assert jnp.allclose(logpx_rev, logpx_ref_r, rtol=1e-5, atol=1e-5), "logpx mismatch (rev)"

    print("KERNEL_OK")
</pallas_src>

<mosaic_0001>
module attributes {stable_mosaic.version = 11 : i64} {
  func.func @coupling_kernel(%arg0: i32, %arg1: i32, %arg2: memref<1x8x256xf32, #tpu.memory_space<vmem>>, %arg3: memref<8x256xbf16, #tpu.memory_space<vmem>>, %arg4: memref<8x8xf32, #tpu.memory_space<vmem>>, %arg5: memref<8x8xf32, #tpu.memory_space<vmem>>, %arg6: memref<8x1xf32, #tpu.memory_space<vmem>>, %arg7: memref<8x1xf32, #tpu.memory_space<vmem>>, %arg8: memref<8x1xf32, #tpu.memory_space<vmem>>, %arg9: memref<8x1xf32, #tpu.memory_space<vmem>>, %arg10: memref<1x1x1xf32, #tpu.memory_space<vmem>>, %arg11: memref<1x8x256xf32, #tpu.memory_space<vmem>>, %arg12: memref<1x1x1xf32, #tpu.memory_space<vmem>>, %arg13: memref<1x1xf32, #tpu.memory_space<vmem>>) attributes {dimension_semantics = [#tpu.dimension_semantics<parallel>, #tpu.dimension_semantics<arbitrary>], iteration_bounds = array<i64: 2, 1>, scalar_prefetch = 0 : i64, scratch_operands = 1 : i64, tpu.core_type = #tpu.core_type<tc>, window_params = [{transform_indices = @transform_0, window_bounds = array<i64: 1, 8, 256>}, {transform_indices = @transform_1, window_bounds = array<i64: 8, 256>}, {pipeline_mode = #tpu.pipeline_mode<synchronous>, transform_indices = @transform_2, window_bounds = array<i64: 8, 8>}, {pipeline_mode = #tpu.pipeline_mode<synchronous>, transform_indices = @transform_3, window_bounds = array<i64: 8, 8>}, {pipeline_mode = #tpu.pipeline_mode<synchronous>, transform_indices = @transform_4, window_bounds = array<i64: 8, 1>}, {pipeline_mode = #tpu.pipeline_mode<synchronous>, transform_indices = @transform_5, window_bounds = array<i64: 8, 1>}, {pipeline_mode = #tpu.pipeline_mode<synchronous>, transform_indices = @transform_6, window_bounds = array<i64: 8, 1>}, {pipeline_mode = #tpu.pipeline_mode<synchronous>, transform_indices = @transform_7, window_bounds = array<i64: 8, 1>}, {transform_indices = @transform_8, window_bounds = array<i64: 1, 1, 1>}, {transform_indices = @transform_9, window_bounds = array<i64: 1, 8, 256>}, {transform_indices = @transform_10, window_bounds = array<i64: 1, 1, 1>}]} {
    %c0_i32 = arith.constant 0 : i32
    %0 = arith.cmpi eq, %arg1, %c0_i32 : i32
    %1 = arith.extui %0 : i1 to i32
    %c0_i32_0 = arith.constant 0 : i32
    %2 = arith.cmpi ne, %1, %c0_i32_0 : i32
    scf.if %2 {
      %cst_29 = arith.constant 0.000000e+00 : f32
      %46 = vector.broadcast %cst_29 : f32 to vector<1x1xf32>
      %c0_30 = arith.constant 0 : index
      %c0_31 = arith.constant 0 : index
      %47 = vector.load %arg13[%c0_30, %c0_31] : memref<1x1xf32, #tpu.memory_space<vmem>>, vector<1x1xf32>
      tpu.vector_store %arg13[%c0_30, %c0_31], %46 {strides = array<i32>} : memref<1x1xf32, #tpu.memory_space<vmem>>, vector<1x1xf32>,
    } else {
    }
    %c0 = arith.constant 0 : index
    %c0_1 = arith.constant 0 : index
    %c0_2 = arith.constant 0 : index
    %3 = vector.load %arg2[%c0, %c0_1, %c0_2] : memref<1x8x256xf32, #tpu.memory_space<vmem>>, vector<1x8x256xf32>
    %4 = vector.shape_cast %3 : vector<1x8x256xf32> to vector<8x256xf32>
    %c0_3 = arith.constant 0 : index
    %c0_4 = arith.constant 0 : index
    %5 = vector.load %arg3[%c0_3, %c0_4] : memref<8x256xbf16, #tpu.memory_space<vmem>>, vector<8x256xbf16>
    %6 = arith.extf %5 : vector<8x256xbf16> to vector<8x256xf32>
    %7 = arith.mulf %4, %6 : vector<8x256xf32>
    %c0_5 = arith.constant 0 : index
    %c0_6 = arith.constant 0 : index
    %8 = vector.load %arg4[%c0_5, %c0_6] : memref<8x8xf32, #tpu.memory_space<vmem>>, vector<8x8xf32>
    %cst = arith.constant dense<0.000000e+00> : vector<8x256xf32>
    %9 = tpu.matmul %8, %7, %cst {dimension_numbers = #tpu.dot_dimension_numbers<[1], [0], [0], [1], [0, 0, 1, 1], [], []>} : vector<8x8xf32>, vector<8x256xf32>, vector<8x256xf32> -> vector<8x256xf32>
    %c0_7 = arith.constant 0 : index
    %c0_8 = arith.constant 0 : index
    %10 = vector.load %arg6[%c0_7, %c0_8] : memref<8x1xf32, #tpu.memory_space<vmem>>, vector<8x1xf32>
    %11 = vector.broadcast %10 : vector<8x1xf32> to vector<8x256xf32>
    %12 = arith.addf %9, %11 : vector<8x256xf32>
    %c0_9 = arith.constant 0 : index
    %c0_10 = arith.constant 0 : index
    %13 = vector.load %arg5[%c0_9, %c0_10] : memref<8x8xf32, #tpu.memory_space<vmem>>, vector<8x8xf32>
    %cst_11 = arith.constant dense<0.000000e+00> : vector<8x256xf32>
    %14 = tpu.matmul %13, %7, %cst_11 {dimension_numbers = #tpu.dot_dimension_numbers<[1], [0], [0], [1], [0, 0, 1, 1], [], []>} : vector<8x8xf32>, vector<8x256xf32>, vector<8x256xf32> -> vector<8x256xf32>
    %c0_12 = arith.constant 0 : index
    %c0_13 = arith.constant 0 : index
    %15 = vector.load %arg7[%c0_12, %c0_13] : memref<8x1xf32, #tpu.memory_space<vmem>>, vector<8x1xf32>
    %16 = vector.broadcast %15 : vector<8x1xf32> to vector<8x256xf32>
    %17 = arith.addf %14, %16 : vector<8x256xf32>
    %c0_14 = arith.constant 0 : index
    %c0_15 = arith.constant 0 : index
    %18 = vector.load %arg9[%c0_14, %c0_15] : memref<8x1xf32, #tpu.memory_space<vmem>>, vector<8x1xf32>
    %19 = vector.broadcast %18 : vector<8x1xf32> to vector<8x256xf32>
    %20 = arith.mulf %12, %19 : vector<8x256xf32>
    %21 = math.tanh %20 : vector<8x256xf32>
    %c0_16 = arith.constant 0 : index
    %c0_17 = arith.constant 0 : index
    %22 = vector.load %arg8[%c0_16, %c0_17] : memref<8x1xf32, #tpu.memory_space<vmem>>, vector<8x1xf32>
    %23 = vector.broadcast %22 : vector<8x1xf32> to vector<8x256xf32>
    %24 = arith.mulf %21, %23 : vector<8x256xf32>
    %cst_18 = arith.constant 1.000000e+00 : f32
    %25 = vector.broadcast %cst_18 : f32 to vector<8x256xf32>
    %26 = arith.subf %25, %6 : vector<8x256xf32>
    %27 = arith.mulf %24, %26 : vector<8x256xf32>
    %28 = arith.mulf %17, %26 : vector<8x256xf32>
    %29 = math.exp %27 : vector<8x256xf32>
    %30 = arith.mulf %4, %29 : vector<8x256xf32>
    %31 = arith.addf %30, %28 : vector<8x256xf32>
    %c0_19 = arith.constant 0 : index
    %c0_20 = arith.constant 0 : index
    %c0_21 = arith.constant 0 : index
    %32 = vector.load %arg11[%c0_19, %c0_20, %c0_21] : memref<1x8x256xf32, #tpu.memory_space<vmem>>, vector<1x8x256xf32>
    %33 = vector.shape_cast %32 : vector<1x8x256xf32> to vector<8x256xf32>
    %34 = vector.shape_cast %31 : vector<8x256xf32> to vector<1x8x256xf32>
    tpu.vector_store %arg11[%c0_19, %c0_20, %c0_21], %34 {strides = array<i32>} : memref<1x8x256xf32, #tpu.memory_space<vmem>>, vector<1x8x256xf32>,
    %c0_22 = arith.constant 0 : index
    %c0_23 = arith.constant 0 : index
    %35 = vector.load %arg13[%c0_22, %c0_23] : memref<1x1xf32, #tpu.memory_space<vmem>>, vector<1x1xf32>
    %36 = vector.shape_cast %27 : vector<8x256xf32> to vector<1x8x256xf32>
    %cst_24 = arith.constant dense<0.000000e+00> : vector<1xf32>
    %37 = vector.multi_reduction <add>, %36, %cst_24 [1, 2] : vector<1x8x256xf32> to vector<1xf32>
    %38 = vector.shape_cast %37 : vector<1xf32> to vector<1x1x1xf32>
    %39 = vector.extract %38[0, 0, 0] : f32 from vector<1x1x1xf32>
    %40 = vector.broadcast %39 : f32 to vector<1x1xf32>
    %41 = arith.addf %35, %40 : vector<1x1xf32>
    %c0_25 = arith.constant 0 : index
    %c0_26 = arith.constant 0 : index
    %42 = vector.load %arg13[%c0_25, %c0_26] : memref<1x1xf32, #tpu.memory_space<vmem>>, vector<1x1xf32>
    tpu.vector_store %arg13[%c0_25, %c0_26], %41 {strides = array<i32>} : memref<1x1xf32, #tpu.memory_space<vmem>>, vector<1x1xf32>,
    %c0_i32_27 = arith.constant 0 : i32
    %43 = arith.cmpi eq, %arg1, %c0_i32_27 : i32
    %44 = arith.extui %43 : i1 to i32
    %c0_i32_28 = arith.constant 0 : i32
    %45 = arith.cmpi ne, %44, %c0_i32_28 : i32
    scf.if %45 {
      %c0_29 = arith.constant 0 : index
      %c0_30 = arith.constant 0 : index
      %c0_31 = arith.constant 0 : index
      %46 = vector.load %arg10[%c0_29, %c0_30, %c0_31] : memref<1x1x1xf32, #tpu.memory_space<vmem>>, vector<1x1x1xf32>
      %47 = vector.shape_cast %46 : vector<1x1x1xf32> to vector<1x1xf32>
      %c0_32 = arith.constant 0 : index
      %c0_33 = arith.constant 0 : index
      %48 = vector.load %arg13[%c0_32, %c0_33] : memref<1x1xf32, #tpu.memory_space<vmem>>, vector<1x1xf32>
      %49 = arith.addf %47, %48 : vector<1x1xf32>
      %c0_34 = arith.constant 0 : index
      %c0_35 = arith.constant 0 : index
      %c0_36 = arith.constant 0 : index
      %50 = vector.load %arg12[%c0_34, %c0_35, %c0_36] : memref<1x1x1xf32, #tpu.memory_space<vmem>>, vector<1x1x1xf32>
      %51 = vector.shape_cast %50 : vector<1x1x1xf32> to vector<1x1xf32>
      %52 = vector.shape_cast %49 : vector<1x1xf32> to vector<1x1x1xf32>
      tpu.vector_store %arg12[%c0_34, %c0_35, %c0_36], %52 {strides = array<i32>} : memref<1x1x1xf32, #tpu.memory_space<vmem>>, vector<1x1x1xf32>,
    } else {
    }
    return
  }
  func.func @transform_0(%arg0: i32, %arg1: i32) -> (i32, i32, i32) {
    %c0_i32 = arith.constant 0 : i32
    %c0_i32_0 = arith.constant 0 : i32
    return %arg0, %c0_i32, %arg1 : i32, i32, i32
  }
  func.func @transform_1(%arg0: i32, %arg1: i32) -> (i32, i32) {
    %c0_i32 = arith.constant 0 : i32
    %c0_i32_0 = arith.constant 0 : i32
    return %c0_i32, %arg1 : i32, i32
  }
  func.func @transform_2(%arg0: i32, %arg1: i32) -> (i32, i32) {
    %c0_i32 = arith.constant 0 : i32
    %c0_i32_0 = arith.constant 0 : i32
    %c0_i32_1 = arith.constant 0 : i32
    return %c0_i32, %c0_i32_0 : i32, i32
  }
  func.func @transform_3(%arg0: i32, %arg1: i32) -> (i32, i32) {
    %c0_i32 = arith.constant 0 : i32
    %c0_i32_0 = arith.constant 0 : i32
    %c0_i32_1 = arith.constant 0 : i32
    return %c0_i32, %c0_i32_0 : i32, i32
  }
  func.func @transform_4(%arg0: i32, %arg1: i32) -> (i32, i32) {
    %c0_i32 = arith.constant 0 : i32
    %c0_i32_0 = arith.constant 0 : i32
    %c0_i32_1 = arith.constant 0 : i32
    return %c0_i32, %c0_i32_0 : i32, i32
  }
  func.func @transform_5(%arg0: i32, %arg1: i32) -> (i32, i32) {
    %c0_i32 = arith.constant 0 : i32
    %c0_i32_0 = arith.constant 0 : i32
    %c0_i32_1 = arith.constant 0 : i32
    return %c0_i32, %c0_i32_0 : i32, i32
  }
  func.func @transform_6(%arg0: i32, %arg1: i32) -> (i32, i32) {
    %c0_i32 = arith.constant 0 : i32
    %c0_i32_0 = arith.constant 0 : i32
    %c0_i32_1 = arith.constant 0 : i32
    return %c0_i32, %c0_i32_0 : i32, i32
  }
  func.func @transform_7(%arg0: i32, %arg1: i32) -> (i32, i32) {
    %c0_i32 = arith.constant 0 : i32
    %c0_i32_0 = arith.constant 0 : i32
    %c0_i32_1 = arith.constant 0 : i32
    return %c0_i32, %c0_i32_0 : i32, i32
  }
  func.func @transform_8(%arg0: i32, %arg1: i32) -> (i32, i32, i32) {
    %c0_i32 = arith.constant 0 : i32
    %c0_i32_0 = arith.constant 0 : i32
    %c0_i32_1 = arith.constant 0 : i32
    return %arg0, %c0_i32, %c0_i32_0 : i32, i32, i32
  }
  func.func @transform_9(%arg0: i32, %arg1: i32) -> (i32, i32, i32) {
    %c0_i32 = arith.constant 0 : i32
    %c0_i32_0 = arith.constant 0 : i32
    return %arg0, %c0_i32, %arg1 : i32, i32, i32
  }
  func.func @transform_10(%arg0: i32, %arg1: i32) -> (i32, i32, i32) {
    %c0_i32 = arith.constant 0 : i32
    %c0_i32_0 = arith.constant 0 : i32
    %c0_i32_1 = arith.constant 0 : i32
    return %arg0, %c0_i32, %c0_i32_0 : i32, i32, i32
  }
}

</mosaic_0001>

<llo_original>
// kernel: tpu_custom_call.1
$region0: #{tpu_custom_call.1}
  #allocation0 [shape = 'u32[]', space=smem, size = 0x4, offset = 0x4, fixed_abs, tag = 'smem constant byte address 0x4 - core index']
  #allocation1 [shape = 'u32[144,128]{1,0:T(1,128)}', space=vmem, size = 0x12000, scoped, tag = 'internal scratch']
  #allocation2 [shape = 'f32[1,1]{1,0:T(1,128)}', space=vmem, size = 0x200, scoped, tag = 'scratch operand']
  %s0 = inlined_call_operand.vmem [shape: f32[2,8,256], index: 0, kind: input, shape index: {}]
  %s1 = inlined_call_operand.vmem [shape: bf16[8,256], index: 1, kind: input, shape index: {}]
  %s2 = inlined_call_operand.hbm [shape: f32[8,8], index: 2, kind: input, shape index: {}]
  %s3 = inlined_call_operand.vmem [shape: f32[8,8], index: 3, kind: input, shape index: {}]
  %s4 = inlined_call_operand.vmem [shape: f32[8,1], index: 4, kind: input, shape index: {}]
  %s5 = inlined_call_operand.vmem [shape: f32[8,1], index: 5, kind: input, shape index: {}]
  %s6 = inlined_call_operand.vmem [shape: f32[8,1], index: 6, kind: input, shape index: {}]
  %s7 = inlined_call_operand.vmem [shape: f32[8,1], index: 7, kind: input, shape index: {}]
  %s8 = inlined_call_operand.vmem [shape: f32[2,1,1], index: 8, kind: input, shape index: {}]
  %s9 = inlined_call_operand.hbm [shape: f32[2,8,256], index: 9, kind: output, shape index: {0}]
  %s10 = inlined_call_operand.vmem [shape: f32[2,1,1], index: 10, kind: output, shape index: {1}]
  %11 = xla_tuple %s9, %s10
  %s12 = sld [smem:[#allocation0]]
  $region89: #{tpu_custom_call.1} parent=0
    _
  %s14 = ssub.s32 1, %s12
  %s15 = scalar_select 0, %s14, %s12
  $region1: #{tpu_custom_call.1} parent=0
    #allocation3 [shape = 'u8[4096]{0}', space=vmem, size = 0x1000, scoped, tag = 'input window, operand 2, single buffered']
    #allocation4 [shape = 's32[2]{0}', space=sflag, size = 0x8, scoped, tag = 'scoped memory for tpu_custom_call.1']
    #allocation5 [shape = 's32[2]{0}', space=sflag, size = 0x8, scoped, tag = 'scoped memory for tpu_custom_call.1']
    #allocation6 [shape = 'u8[16384]{0}', space=vmem, size = 0x4000, scoped, tag = 'output window, operand 0']
    %16 = vsyncpa [#allocation4], 0
    %17 = vsyncpa [#allocation5], 0
    %s18 = scalar_lea.sflag [#allocation5], 1
    %19 = vsyncpa %s18, 0
    loop: start=0, step=1, limit=4
    $region2: #{tpu_custom_call.1} parent=1 // loop_pre_header
      _
    $region3: #{tpu_custom_call.1} parent=1 // loop_header
      %s21 = sphi 0, %s25
      %p22 = scmp.ge.s32.totalorder %s21, 4
      %s28 = sphi 0, %s40
      %s29 = sphi 0, %s36
      %s30 = sphi 0, %s28
      %s31 = sphi 0, %s29
      %s32 = sphi 0, %s30
      %s33 = sphi 0, %s31
      %s45 = sphi 0, %s47
      %s48 = sphi 0, %s45
      %s49 = sphi 0, %s48
      %s65 = sphi 0, %s49
      %s71 = sphi 0, %s73
      %s74 = sphi 0, %s71
      %s75 = sphi 0, %s74
      %s91 = sphi 0, %s75
      %s95 = sphi 0, %s95
      %s97 = sphi 0, %s95
      %s98 = sphi 0, %s97
      %s112 = sphi 0, %s98
      %s116 = sphi 0, %s116
      %s118 = sphi 0, %s116
      %s119 = sphi 0, %s118
      %s133 = sphi 0, %s119
      %s137 = sphi 0, %s137
      %s139 = sphi 0, %s137
      %s140 = sphi 0, %s139
      %s154 = sphi 0, %s140
      %s158 = sphi 0, %s158
      %s160 = sphi 0, %s158
      %s161 = sphi 0, %s160
      %s175 = sphi 0, %s161
      %s179 = sphi 0, %s179
      %s181 = sphi 0, %s179
      %s182 = sphi 0, %s181
      %s196 = sphi 0, %s182
      %s200 = sphi 0, %s200
      %s202 = sphi 0, %s200
      %s203 = sphi 0, %s202
      %s217 = sphi 0, %s203
      %s223 = sphi 0, %s225
      %s226 = sphi 0, %s223
      %s227 = sphi 0, %s226
      %s243 = sphi 0, %s227
      %s251 = sphi 0, %s253
      %s254 = sphi 0, %s251
      %s255 = sphi 0, %s254
      %s271 = sphi 0, %s255
      %s277 = sphi 0, %s279
      %s280 = sphi 0, %s277
      %s281 = sphi 0, %s280
      %s297 = sphi 0, %s281
    $region4: #{tpu_custom_call.1} parent=1 // loop_header_branch
      %24 = sbr.rel (%p22) target = $region8
    $region5: #{tpu_custom_call.1} parent=1 // loop_body
      %s26 = ssub.s32 %s21, 1
      %s27 = ssub.s32 %s21, 2
      %s34 = sadd.s32 1, %s29
      %p35 = scmp.ge.s32.totalorder %s34, 1
      %s36 = scalar_select %p35, 0, %s34
      %s37 = sadd.s32 1, %s28
      %s38 = scalar_select %p35, %s37, %s28
      %p39 = scmp.ge.s32.totalorder %s38, 2
      %s40 = scalar_select %p39, 0, %s38
      %s41 = ssub.s32 %s28, %s40
      %s42 = ssub.s32 %s29, %s36
      %s43 = sor.u32 %s41, %s42
      %p44 = scmp.eq.s32.totalorder %s43, 0
      %s46 = sadd.s32 %s45, 1
      %s47 = scalar_select %p44, %s45, %s46
      %p50 = pneg %p44
      %p51 = scmp.eq.s32.totalorder %s21, 1
      %p52 = por %p50, %p51
      %p53 = scmp.ne.s32.totalorder %s45, %s48
      %p54 = scmp.eq.s32.totalorder %s21, 0
      %p55 = por %p53, %p54
      %p56 = scmp.ne.s32.totalorder %s45, %s48
      %p57 = scmp.eq.s32.totalorder %s26, 1
      %p58 = por %p56, %p57
      %p59 = scmp.ne.s32.totalorder %s48, %s49
      %p60 = scmp.eq.s32.totalorder %s26, 0
      %p61 = por %p59, %p60
      %p62 = scmp.ne.s32.totalorder %s48, %s49
      %p63 = scmp.eq.s32.totalorder %s27, 1
      %p64 = por %p62, %p63
      %p66 = scmp.ne.s32.totalorder %s49, %s65
      %p67 = scmp.eq.s32.totalorder %s27, 0
      %p68 = por %p66, %p67
      %s69 = ssub.s32 %s29, %s36
      %p70 = scmp.eq.s32.totalorder %s69, 0
      %s72 = sadd.s32 %s71, 1
      %s73 = scalar_select %p70, %s71, %s72
      %p76 = pneg %p70
      %p77 = scmp.eq.s32.totalorder %s21, 1
      %p78 = por %p76, %p77
      %p79 = scmp.ne.s32.totalorder %s71, %s74
      %p80 = scmp.eq.s32.totalorder %s21, 0
      %p81 = por %p79, %p80
      %p82 = scmp.ne.s32.totalorder %s71, %s74
      %p83 = scmp.eq.s32.totalorder %s26, 1
      %p84 = por %p82, %p83
      %p85 = scmp.ne.s32.totalorder %s74, %s75
      %p86 = scmp.eq.s32.totalorder %s26, 0
      %p87 = por %p85, %p86
      %p88 = scmp.ne.s32.totalorder %s74, %s75
      %p89 = scmp.eq.s32.totalorder %s27, 1
      %p90 = por %p88, %p89
      %p92 = scmp.ne.s32.totalorder %s75, %s91
      %p93 = scmp.eq.s32.totalorder %s27, 0
      %p94 = por %p92, %p93
      %s96 = sadd.s32 %s95, 1
      %p99 = scmp.eq.s32.totalorder %s21, 1
      %p100 = scmp.ne.s32.totalorder %s95, %s97
      %p101 = scmp.eq.s32.totalorder %s21, 0
      %p102 = por %p100, %p101
      %p103 = scmp.ne.s32.totalorder %s95, %s97
      %p104 = scmp.eq.s32.totalorder %s26, 1
      %p105 = por %p103, %p104
      %p106 = scmp.ne.s32.totalorder %s97, %s98
      %p107 = scmp.eq.s32.totalorder %s26, 0
      %p108 = por %p106, %p107
      %p109 = scmp.ne.s32.totalorder %s97, %s98
      %p110 = scmp.eq.s32.totalorder %s27, 1
      %p111 = por %p109, %p110
      %p113 = scmp.ne.s32.totalorder %s98, %s112
      %p114 = scmp.eq.s32.totalorder %s27, 0
      %p115 = por %p113, %p114
      %s117 = sadd.s32 %s116, 1
      %p120 = scmp.eq.s32.totalorder %s21, 1
      %p121 = scmp.ne.s32.totalorder %s116, %s118
      %p122 = scmp.eq.s32.totalorder %s21, 0
      %p123 = por %p121, %p122
      %p124 = scmp.ne.s32.totalorder %s116, %s118
      %p125 = scmp.eq.s32.totalorder %s26, 1
      %p126 = por %p124, %p125
      %p127 = scmp.ne.s32.totalorder %s118, %s119
      %p128 = scmp.eq.s32.totalorder %s26, 0
      %p129 = por %p127, %p128
      %p130 = scmp.ne.s32.totalorder %s118, %s119
      %p131 = scmp.eq.s32.totalorder %s27, 1
      %p132 = por %p130, %p131
      %p134 = scmp.ne.s32.totalorder %s119, %s133
      %p135 = scmp.eq.s32.totalorder %s27, 0
      %p136 = por %p134, %p135
      %s138 = sadd.s32 %s137, 1
      %p141 = scmp.eq.s32.totalorder %s21, 1
      %p142 = scmp.ne.s32.totalorder %s137, %s139
      %p143 = scmp.eq.s32.totalorder %s21, 0
      %p144 = por %p142, %p143
      %p145 = scmp.ne.s32.totalorder %s137, %s139
      %p146 = scmp.eq.s32.totalorder %s26, 1
      %p147 = por %p145, %p146
      %p148 = scmp.ne.s32.totalorder %s139, %s140
      %p149 = scmp.eq.s32.totalorder %s26, 0
      %p150 = por %p148, %p149
      %p151 = scmp.ne.s32.totalorder %s139, %s140
      %p152 = scmp.eq.s32.totalorder %s27, 1
      %p153 = por %p151, %p152
      %p155 = scmp.ne.s32.totalorder %s140, %s154
      %p156 = scmp.eq.s32.totalorder %s27, 0
      %p157 = por %p155, %p156
      %s159 = sadd.s32 %s158, 1
      %p162 = scmp.eq.s32.totalorder %s21, 1
      %p163 = scmp.ne.s32.totalorder %s158, %s160
      %p164 = scmp.eq.s32.totalorder %s21, 0
      %p165 = por %p163, %p164
      %p166 = scmp.ne.s32.totalorder %s158, %s160
      %p167 = scmp.eq.s32.totalorder %s26, 1
      %p168 = por %p166, %p167
      %p169 = scmp.ne.s32.totalorder %s160, %s161
      %p170 = scmp.eq.s32.totalorder %s26, 0
      %p171 = por %p169, %p170
      %p172 = scmp.ne.s32.totalorder %s160, %s161
      %p173 = scmp.eq.s32.totalorder %s27, 1
      %p174 = por %p172, %p173
      %p176 = scmp.ne.s32.totalorder %s161, %s175
      %p177 = scmp.eq.s32.totalorder %s27, 0
      %p178 = por %p176, %p177
      %s180 = sadd.s32 %s179, 1
      %p183 = scmp.eq.s32.totalorder %s21, 1
      %p184 = scmp.ne.s32.totalorder %s179, %s181
      %p185 = scmp.eq.s32.totalorder %s21, 0
      %p186 = por %p184, %p185
      %p187 = scmp.ne.s32.totalorder %s179, %s181
      %p188 = scmp.eq.s32.totalorder %s26, 1
      %p189 = por %p187, %p188
      %p190 = scmp.ne.s32.totalorder %s181, %s182
      %p191 = scmp.eq.s32.totalorder %s26, 0
      %p192 = por %p190, %p191
      %p193 = scmp.ne.s32.totalorder %s181, %s182
      %p194 = scmp.eq.s32.totalorder %s27, 1
      %p195 = por %p193, %p194
      %p197 = scmp.ne.s32.totalorder %s182, %s196
      %p198 = scmp.eq.s32.totalorder %s27, 0
      %p199 = por %p197, %p198
      %s201 = sadd.s32 %s200, 1
      %p204 = scmp.eq.s32.totalorder %s21, 1
      %p205 = scmp.ne.s32.totalorder %s200, %s202
      %p206 = scmp.eq.s32.totalorder %s21, 0
      %p207 = por %p205, %p206
      %p208 = scmp.ne.s32.totalorder %s200, %s202
      %p209 = scmp.eq.s32.totalorder %s26, 1
      %p210 = por %p208, %p209
      %p211 = scmp.ne.s32.totalorder %s202, %s203
      %p212 = scmp.eq.s32.totalorder %s26, 0
      %p213 = por %p211, %p212
      %p214 = scmp.ne.s32.totalorder %s202, %s203
      %p215 = scmp.eq.s32.totalorder %s27, 1
      %p216 = por %p214, %p215
      %p218 = scmp.ne.s32.totalorder %s203, %s217
      %p219 = scmp.eq.s32.totalorder %s27, 0
      %p220 = por %p218, %p219
      %s221 = ssub.s32 %s28, %s40
      %p222 = scmp.eq.s32.totalorder %s221, 0
      %s224 = sadd.s32 %s223, 1
      %s225 = scalar_select %p222, %s223, %s224
      %p228 = pneg %p222
      %p229 = scmp.eq.s32.totalorder %s21, 1
      %p230 = por %p228, %p229
      %p231 = scmp.ne.s32.totalorder %s223, %s226
      %p232 = scmp.eq.s32.totalorder %s21, 0
      %p233 = por %p231, %p232
      %p234 = scmp.ne.s32.totalorder %s223, %s226
      %p235 = scmp.eq.s32.totalorder %s26, 1
      %p236 = por %p234, %p235
      %p237 = scmp.ne.s32.totalorder %s226, %s227
      %p238 = scmp.eq.s32.totalorder %s26, 0
      %p239 = por %p237, %p238
      %p240 = scmp.ne.s32.totalorder %s226, %s227
      %p241 = scmp.eq.s32.totalorder %s27, 1
      %p242 = por %p240, %p241
      %p244 = scmp.ne.s32.totalorder %s227, %s243
      %p245 = scmp.eq.s32.totalorder %s27, 0
      %p246 = por %p244, %p245
      %s247 = ssub.s32 %s28, %s40
      %s248 = ssub.s32 %s29, %s36
      %s249 = sor.u32 %s247, %s248
      %p250 = scmp.eq.s32.totalorder %s249, 0
      %s252 = sadd.s32 %s251, 1
      %s253 = scalar_select %p250, %s251, %s252
      %p256 = pneg %p250
      %p257 = scmp.eq.s32.totalorder %s21, 1
      %p258 = por %p256, %p257
      %p259 = scmp.ne.s32.totalorder %s251, %s254
      %p260 = scmp.eq.s32.totalorder %s21, 0
      %p261 = por %p259, %p260
      %p262 = scmp.ne.s32.totalorder %s251, %s254
      %p263 = scmp.eq.s32.totalorder %s26, 1
      %p264 = por %p262, %p263
      %p265 = scmp.ne.s32.totalorder %s254, %s255
      %p266 = scmp.eq.s32.totalorder %s26, 0
      %p267 = por %p265, %p266
      %p268 = scmp.ne.s32.totalorder %s254, %s255
      %p269 = scmp.eq.s32.totalorder %s27, 1
      %p270 = por %p268, %p269
      %p272 = scmp.ne.s32.totalorder %s255, %s271
      %p273 = scmp.eq.s32.totalorder %s27, 0
      %p274 = por %p272, %p273
      %s275 = ssub.s32 %s28, %s40
      %p276 = scmp.eq.s32.totalorder %s275, 0
      %s278 = sadd.s32 %s277, 1
      %s279 = scalar_select %p276, %s277, %s278
      %p282 = pneg %p276
      %p283 = scmp.eq.s32.totalorder %s21, 1
      %p284 = por %p282, %p283
      %p285 = scmp.ne.s32.totalorder %s277, %s280
      %p286 = scmp.eq.s32.totalorder %s21, 0
      %p287 = por %p285, %p286
      %p288 = scmp.ne.s32.totalorder %s277, %s280
      %p289 = scmp.eq.s32.totalorder %s26, 1
      %p290 = por %p288, %p289
      %p291 = scmp.ne.s32.totalorder %s280, %s281
      %p292 = scmp.eq.s32.totalorder %s26, 0
      %p293 = por %p291, %p292
      %p294 = scmp.ne.s32.totalorder %s280, %s281
      %p295 = scmp.eq.s32.totalorder %s27, 1
      %p296 = por %p294, %p295
      %p298 = scmp.ne.s32.totalorder %s281, %s297
      %p299 = scmp.eq.s32.totalorder %s27, 0
      %p300 = por %p298, %p299
      %p301 = scmp.le.s32.totalorder 1, %s21
      %p302 = scmp.lt.s32.totalorder %s21, 3
      %p303 = pnand %p301, %p302
      %p304 = pneg %p303
      // Predicated region
      $region9: #{tpu_custom_call.1} parent=5 // pred_check
        _
      $region10: #{tpu_custom_call.1} parent=5 // pred_check_branch
        %306 = sbr.rel (%p303) target = $region12
      $region11: #{tpu_custom_call.1} parent=5 // pred_region
        %s307 = ssub.s32 %s21, 1
        // Predicated region
        $region13: #{tpu_custom_call.1} parent=11 // pred_check
          %p308 = pneg %p87
        $region14: #{tpu_custom_call.1} parent=11 // pred_check_branch
          %310 = sbr.rel (%p308) target = $region16
        $region15: #{tpu_custom_call.1} parent=11 // pred_region
          %s311 = smul.u32 2, %s31
          %p312 = scmp.lt.s32.totalorder %s311, 1
          %s313 = scalar_select %p312, %s311, 1
          %s314 = smul.addr %s313, 4
          %s315 = scalar_lea.vmem %s1, %s314
          %s316 = smul.u32 2, %s31
        $region16: #{tpu_custom_call.1} parent=11 // pred_fallthru
          _
        // Predicated region
        $region17: #{tpu_custom_call.1} parent=11 // pred_check
          %p317 = pneg %p108
        $region18: #{tpu_custom_call.1} parent=11 // pred_check_branch
          %319 = sbr.rel (%p317) target = $region20
        $region19: #{tpu_custom_call.1} parent=11 // pred_region
          %s321 = ssub.s32 128, 128
          %322 = vsyncadd [#allocation4], %s321
          %s324 = sshll.u32 [#allocation3], 4
          %s325 = int_to_ptr.vmem [resolvable:$true] %s324
          %327 = dma.hbm_to_vmem [thread:$0]  %s2, 128, %s325, [#allocation4]
        $region20: #{tpu_custom_call.1} parent=11 // pred_fallthru
          _
        // Predicated region
        $region21: #{tpu_custom_call.1} parent=11 // pred_check
          %p328 = pneg %p129
        $region22: #{tpu_custom_call.1} parent=11 // pred_check_branch
          %330 = sbr.rel (%p328) target = $region24
        $region23: #{tpu_custom_call.1} parent=11 // pred_region
          _
        $region24: #{tpu_custom_call.1} parent=11 // pred_fallthru
          _
        // Predicated region
        $region25: #{tpu_custom_call.1} parent=11 // pred_check
          %p331 = pneg %p150
        $region26: #{tpu_custom_call.1} parent=11 // pred_check_branch
          %333 = sbr.rel (%p331) target = $region28
        $region27: #{tpu_custom_call.1} parent=11 // pred_region
          _
        $region28: #{tpu_custom_call.1} parent=11 // pred_fallthru
          _
        // Predicated region
        $region29: #{tpu_custom_call.1} parent=11 // pred_check
          %p334 = pneg %p171
        $region30: #{tpu_custom_call.1} parent=11 // pred_check_branch
          %336 = sbr.rel (%p334) target = $region32
        $region31: #{tpu_custom_call.1} parent=11 // pred_region
          _
        $region32: #{tpu_custom_call.1} parent=11 // pred_fallthru
          _
        // Predicated region
        $region33: #{tpu_custom_call.1} parent=11 // pred_check
          %p337 = pneg %p192
        $region34: #{tpu_custom_call.1} parent=11 // pred_check_branch
          %339 = sbr.rel (%p337) target = $region36
        $region35: #{tpu_custom_call.1} parent=11 // pred_region
          _
        $region36: #{tpu_custom_call.1} parent=11 // pred_fallthru
          _
        // Predicated region
        $region37: #{tpu_custom_call.1} parent=11 // pred_check
          %p340 = pneg %p213
        $region38: #{tpu_custom_call.1} parent=11 // pred_check_branch
          %342 = sbr.rel (%p340) target = $region40
        $region39: #{tpu_custom_call.1} parent=11 // pred_region
          _
        $region40: #{tpu_custom_call.1} parent=11 // pred_fallthru
          _
      $region12: #{tpu_custom_call.1} parent=5 // pred_fallthru
        _
      %p343 = scmp.lt.s32.totalorder %s21, 2
      // Predicated region
      $region41: #{tpu_custom_call.1} parent=5 // pred_check
        %p344 = pneg %p343
      $region42: #{tpu_custom_call.1} parent=5 // pred_check_branch
        %346 = sbr.rel (%p344) target = $region44
      $region43: #{tpu_custom_call.1} parent=5 // pred_region
        // Predicated region
        $region45: #{tpu_custom_call.1} parent=43 // pred_check
          %p347 = pneg %p55
        $region46: #{tpu_custom_call.1} parent=43 // pred_check_branch
          %349 = sbr.rel (%p347) target = $region48
        $region47: #{tpu_custom_call.1} parent=43 // pred_region
          %s350 = smul.u32 2, %s29
          %p351 = scmp.lt.s32.totalorder %s28, 1
          %s352 = scalar_select %p351, %s28, 1
          %p353 = scmp.lt.s32.totalorder %s350, 1
          %s354 = scalar_select %p353, %s350, 1
          %s355 = smul.addr %s352, 2
          %s356 = sadd.s32 %s354, %s355
          %s357 = smul.addr %s356, 8
          %s358 = scalar_lea.vmem %s0, %s357
          %s359 = smul.u32 2, %s29
        $region48: #{tpu_custom_call.1} parent=43 // pred_fallthru
          _
        // Predicated region
        $region49: #{tpu_custom_call.1} parent=43 // pred_check
          %p360 = pneg %p233
        $region50: #{tpu_custom_call.1} parent=43 // pred_check_branch
          %362 = sbr.rel (%p360) target = $region52
        $region51: #{tpu_custom_call.1} parent=43 // pred_region
          %p363 = scmp.lt.s32.totalorder %s28, 1
          %s364 = scalar_select %p363, %s28, 1
          %s365 = scalar_lea.vmem %s8, %s364
        $region52: #{tpu_custom_call.1} parent=43 // pred_fallthru
          _
      $region44: #{tpu_custom_call.1} parent=5 // pred_fallthru
        _
      %p366 = scmp.le.s32.totalorder 1, %s21
      %p367 = scmp.lt.s32.totalorder %s21, 3
      %p368 = pnand %p366, %p367
      %p369 = pneg %p368
      // Predicated region
      $region53: #{tpu_custom_call.1} parent=5 // pred_check
        _
      $region54: #{tpu_custom_call.1} parent=5 // pred_check_branch
        %371 = sbr.rel (%p368) target = $region56
      $region55: #{tpu_custom_call.1} parent=5 // pred_region
        %s372 = ssub.s32 %s21, 1
        // Predicated region
        $region57: #{tpu_custom_call.1} parent=55 // pred_check
          %p373 = pneg %p108
        $region58: #{tpu_custom_call.1} parent=55 // pred_check_branch
          %375 = sbr.rel (%p373) target = $region60
        $region59: #{tpu_custom_call.1} parent=55 // pred_region
          %376 = dma.done [#allocation4], 128
        $region60: #{tpu_custom_call.1} parent=55 // pred_fallthru
          _
        %s377 = smul.u32 2, %s31
        %p378 = scmp.lt.s32.totalorder %s30, 1
        %s379 = scalar_select %p378, %s30, 1
        %p380 = scmp.lt.s32.totalorder %s377, 1
        %s381 = scalar_select %p380, %s377, 1
        %s382 = smul.addr %s379, 2
        %s383 = sadd.s32 %s381, %s382
        %s384 = smul.addr %s383, 8
        %s385 = scalar_lea.vmem %s0, %s384
        %p386 = pneg %p61
        %p387 = pneg %p58
        %s388 = smul.u32 2, %s31
        %p389 = scmp.lt.s32.totalorder %s388, 1
        %s390 = scalar_select %p389, %s388, 1
        %s391 = smul.addr %s390, 4
        %s392 = scalar_lea.vmem %s1, %s391
        %p393 = pneg %p87
        %p394 = pneg %p84
        %p395 = pneg %p108
        %p396 = pneg %p105
        %p397 = pneg %p129
        %p398 = pneg %p126
        %p399 = pneg %p150
        %p400 = pneg %p147
        %p401 = pneg %p171
        %p402 = pneg %p168
        %p403 = pneg %p192
        %p404 = pneg %p189
        %p405 = pneg %p213
        %p406 = pneg %p210
        %p407 = scmp.lt.s32.totalorder %s30, 1
        %s408 = scalar_select %p407, %s30, 1
        %s409 = scalar_lea.vmem %s8, %s408
        %p410 = pneg %p239
        %p411 = pneg %p236
        %p412 = pneg %p267
        %p413 = pneg %p264
        %s414 = sand.u32 %s254, 1
        %s415 = scalar_lea.sflag [#allocation5], %s414
        %s416 = sand.u32 %s254, 1
        %s417 = smul.addr %s416, 16
        %s418 = scalar_lea.vmem [#allocation6], %s417
        %p419 = pneg %p293
        %p420 = pneg %p290
        %p421 = scmp.lt.s32.totalorder %s30, 1
        %s422 = scalar_select %p421, %s30, 1
        %s423 = scalar_lea.vmem %s10, %s422
        %s424 = smul.u32 2, %s31
        %p425 = scmp.lt.s32.totalorder %s30, 1
        %s426 = scalar_select %p425, %s30, 1
        %p427 = scmp.lt.s32.totalorder %s424, 1
        %s428 = scalar_select %p427, %s424, 1
        %s429 = smul.addr %s426, 2
        %s430 = sadd.s32 %s428, %s429
        %s431 = smul.addr %s430, 8
        %s432 = scalar_lea.vmem %s0, %s431
        %s433 = smul.u32 2, %s31
        %s434 = smul.u32 2, %s31
        %p435 = scmp.lt.s32.totalorder %s434, 1
        %s436 = scalar_select %p435, %s434, 1
        %s437 = smul.addr %s436, 4
        %s438 = scalar_lea.vmem %s1, %s437
        %s439 = smul.u32 2, %s31
        %p440 = scmp.lt.s32.totalorder %s30, 1
        %s441 = scalar_select %p440, %s30, 1
        %s442 = scalar_lea.vmem %s8, %s441
        %s443 = smul.u32 2, %s31
        %p444 = scmp.lt.s32.totalorder %s30, 1
        %s445 = scalar_select %p444, %s30, 1
        %s446 = scalar_lea.vmem %s10, %s445
        %p447 = scmp.eq.s32.totalorder %s31, 0
        // Predicated region
        $region61: #{tpu_custom_call.1} parent=55 // pred_check
          %p448 = pneg %p447
        $region62: #{tpu_custom_call.1} parent=55 // pred_check_branch
          %450 = sbr.rel (%p448) target = $region64
        $region63: #{tpu_custom_call.1} parent=55 // pred_region
          %vm451 = vcmask 0
          %452 = vst.msk [vmem:[#allocation2] sm:$0x1] %vm451, 0.0
        $region64: #{tpu_custom_call.1} parent=55 // pred_fallthru
          _
        %v453 = vld [vmem:[%s432] sm:$0xff]
        %v454 = vld [vmem:[%s432 + $0x8] sm:$0xff]
        %v455 = vld [vmem:[%s438] sm:$0xff]
        %v456 = vunpack.c.l.bf16 %v455
        %v457 = vunpack.c.h.bf16 %v455
        %v458 = vmul.f32 %v453, %v456
        %v459 = vmul.f32 %v454, %v457
        %v460 = vld [vmem:[#allocation3] sm:$0xff]
        %v461 = vld [vmem:[%s4] sm:$0xff]
        %463 = vset.pattern.permute.xlu0 0
        %464 = vperm.xlu0 %463, %v461
        %v465 = vpop.permute.xlu0 %464
        %vm467 = vcmask 64512
        %v469 = vsel %vm467, %v460, 0
        %471 = vmatprep.subr.mxu0 %v459
        %472 = vmatpush1.msra.mxu0 %v458
        %473 = vmatprep.subr.mxu0 0.0
        %474 = vmatpush1.msra.mxu0 0.0
        %475 = vmatprep.subr.mxu0 0.0
        %476 = vmatpush1.msra.mxu0 0.0
        %477 = vmatprep.subr.mxu0 0.0
        %478 = vmatpush1.msra.mxu0 0.0
        %479 = vmatprep.subr.mxu0 0.0
        %480 = vmatpush1.msra.mxu0 0.0
        %481 = vmatprep.subr.mxu0 0.0
        %482 = vmatpush1.msra.mxu0 0.0
        %483 = vmatprep.subr.mxu0 0.0
        %484 = vmatpush1.msra.mxu0 0.0
        %485 = vmatprep.subr.mxu0 0.0
        %486 = vmatpush1.msra.mxu0 0.0
        %487 = vmatprep.subr.mxu0 0.0
        %488 = vmatpush1.msra.mxu0 0.0
        %489 = vmatprep.subr.mxu0 0.0
        %490 = vmatpush1.msra.mxu0 0.0
        %491 = vmatprep.subr.mxu0 0.0
        %492 = vmatpush1.msra.mxu0 0.0
        %493 = vmatprep.subr.mxu0 0.0
        %494 = vmatpush1.msra.mxu0 0.0
        %495 = vmatprep.subr.mxu0 0.0
        %496 = vmatpush1.msra.mxu0 0.0
        %497 = vmatprep.subr.mxu0 0.0
        %498 = vmatpush1.msra.mxu0 0.0
        %499 = vmatprep.subr.mxu0 0.0
        %500 = vmatpush1.msra.mxu0 0.0
        %501 = vmatprep.subr.mxu0 0.0
        %502 = vmatpush1.msra.mxu0 0.0
        %503 = vmatprep.subr.mxu0 0.0
        %504 = vmatpush1.msra.mxu0 0.0
        %505 = vmatprep.subr.mxu0 0.0
        %506 = vmatpush1.msra.mxu0 0.0
        %507 = vmatprep.subr.mxu0 0.0
        %508 = vmatpush1.msra.mxu0 0.0
        %509 = vmatprep.subr.mxu0 0.0
        %510 = vmatpush1.msra.mxu0 0.0
        %511 = vmatprep.subr.mxu0 0.0
        %512 = vmatpush1.msra.mxu0 0.0
        %513 = vmatprep.subr.mxu0 0.0
        %514 = vmatpush1.msra.mxu0 0.0
        %515 = vmatprep.subr.mxu0 0.0
        %516 = vmatpush1.msra.mxu0 0.0
        %517 = vmatprep.subr.mxu0 0.0
        %518 = vmatpush1.msra.mxu0 0.0
        %519 = vmatprep.subr.mxu0 0.0
        %520 = vmatpush1.msra.mxu0 0.0
        %521 = vmatprep.subr.mxu0 0.0
        %522 = vmatpush1.msra.mxu0 0.0
        %523 = vmatprep.subr.mxu0 0.0
        %524 = vmatpush1.msra.mxu0 0.0
        %525 = vmatprep.subr.mxu0 0.0
        %526 = vmatpush1.msra.mxu0 0.0
        %527 = vmatprep.subr.mxu0 0.0
        %528 = vmatpush1.msra.mxu0 0.0
        %529 = vmatprep.subr.mxu0 0.0
        %530 = vmatpush1.msra.mxu0 0.0
        %531 = vmatprep.subr.mxu0 0.0
        %532 = vmatpush1.msra.mxu0 0.0
        %533 = vmatprep.subr.mxu0 0.0
        %534 = vmatpush1.msra.mxu0 0.0
        %535 = vmatprep.mubr.f32.mxu0 0.0
        %536 = vmatmul.mubr.f32.gmra.mrb[0].mxu0 %v469
        %v537 = vpop.f32.mrb[0].mxu0
        %v538 = vadd.f32 %v465, %v537
        %v539 = vpop.f32.mrb[0].mxu0
        %v540 = vadd.f32 %v465, %v539
        %541 = vdwg.mxu0
        %v542 = vld [vmem:[%s3] sm:$0xff]
        %v543 = vld [vmem:[%s5] sm:$0xff]
        %545 = vset.pattern.permute.xlu0 0
        %546 = vperm.xlu0 %545, %v543
        %v547 = vpop.permute.xlu0 %546
        %v550 = vsel %vm467, %v542, 0
        %552 = vmatprep.subr.mxu0 %v459
        %553 = vmatpush1.msra.mxu0 %v458
        %554 = vmatprep.subr.mxu0 0.0
        %555 = vmatpush1.msra.mxu0 0.0
        %556 = vmatprep.subr.mxu0 0.0
        %557 = vmatpush1.msra.mxu0 0.0
        %558 = vmatprep.subr.mxu0 0.0
        %559 = vmatpush1.msra.mxu0 0.0
        %560 = vmatprep.subr.mxu0 0.0
        %561 = vmatpush1.msra.mxu0 0.0
        %562 = vmatprep.subr.mxu0 0.0
        %563 = vmatpush1.msra.mxu0 0.0
        %564 = vmatprep.subr.mxu0 0.0
        %565 = vmatpush1.msra.mxu0 0.0
        %566 = vmatprep.subr.mxu0 0.0
        %567 = vmatpush1.msra.mxu0 0.0
        %568 = vmatprep.subr.mxu0 0.0
        %569 = vmatpush1.msra.mxu0 0.0
        %570 = vmatprep.subr.mxu0 0.0
        %571 = vmatpush1.msra.mxu0 0.0
        %572 = vmatprep.subr.mxu0 0.0
        %573 = vmatpush1.msra.mxu0 0.0
        %574 = vmatprep.subr.mxu0 0.0
        %575 = vmatpush1.msra.mxu0 0.0
        %576 = vmatprep.subr.mxu0 0.0
        %577 = vmatpush1.msra.mxu0 0.0
        %578 = vmatprep.subr.mxu0 0.0
        %579 = vmatpush1.msra.mxu0 0.0
        %580 = vmatprep.subr.mxu0 0.0
        %581 = vmatpush1.msra.mxu0 0.0
        %582 = vmatprep.subr.mxu0 0.0
        %583 = vmatpush1.msra.mxu0 0.0
        %584 = vmatprep.subr.mxu0 0.0
        %585 = vmatpush1.msra.mxu0 0.0
        %586 = vmatprep.subr.mxu0 0.0
        %587 = vmatpush1.msra.mxu0 0.0
        %588 = vmatprep.subr.mxu0 0.0
        %589 = vmatpush1.msra.mxu0 0.0
        %590 = vmatprep.subr.mxu0 0.0
        %591 = vmatpush1.msra.mxu0 0.0
        %592 = vmatprep.subr.mxu0 0.0
        %593 = vmatpush1.msra.mxu0 0.0
        %594 = vmatprep.subr.mxu0 0.0
        %595 = vmatpush1.msra.mxu0 0.0
        %596 = vmatprep.subr.mxu0 0.0
        %597 = vmatpush1.msra.mxu0 0.0
        %598 = vmatprep.subr.mxu0 0.0
        %599 = vmatpush1.msra.mxu0 0.0
        %600 = vmatprep.subr.mxu0 0.0
        %601 = vmatpush1.msra.mxu0 0.0
        %602 = vmatprep.subr.mxu0 0.0
        %603 = vmatpush1.msra.mxu0 0.0
        %604 = vmatprep.subr.mxu0 0.0
        %605 = vmatpush1.msra.mxu0 0.0
        %606 = vmatprep.subr.mxu0 0.0
        %607 = vmatpush1.msra.mxu0 0.0
        %608 = vmatprep.subr.mxu0 0.0
        %609 = vmatpush1.msra.mxu0 0.0
        %610 = vmatprep.subr.mxu0 0.0
        %611 = vmatpush1.msra.mxu0 0.0
        %612 = vmatprep.subr.mxu0 0.0
        %613 = vmatpush1.msra.mxu0 0.0
        %614 = vmatprep.subr.mxu0 0.0
        %615 = vmatpush1.msra.mxu0 0.0
        %616 = vmatprep.mubr.f32.mxu0 0.0
        %617 = vmatmul.mubr.f32.gmra.mrb[0].mxu0 %v550
        %v618 = vpop.f32.mrb[0].mxu0
        %v619 = vadd.f32 %v547, %v618
        %v620 = vpop.f32.mrb[0].mxu0
        %v621 = vadd.f32 %v547, %v620
        %622 = vdwg.mxu0
        %v623 = vld [vmem:[%s7] sm:$0xff]
        %625 = vset.pattern.permute.xlu0 0
        %626 = vperm.xlu0 %625, %v623
        %v627 = vpop.permute.xlu0 %626
        %v629 = vmul.f32 %v538, %v627
        %v630 = vmul.f32 %v540, %v627
        %v631 = vtanh.pop %v629
        %v632 = vtanh.pop %v630
        %v633 = vld [vmem:[%s6] sm:$0xff]
        %635 = vset.pattern.permute.xlu0 0
        %636 = vperm.xlu0 %635, %v633
        %v637 = vpop.permute.xlu0 %636
        %v639 = vmul.f32 %v631, %v637
        %v640 = vmul.f32 %v632, %v637
        %v641 = vsub.f32 1.0, %v456
        %v642 = vsub.f32 1.0, %v457
        %v643 = vmul.f32 %v639, %v641
        %v644 = vmul.f32 %v640, %v642
        %v645 = vmul.f32 %v619, %v641
        %v646 = vmul.f32 %v621, %v642
        %v647 = vmul.f32 %v643, 1.442695
        %v648 = vpow.pop %v647
        %v649 = vmul.f32 %v644, 1.442695
        %v650 = vpow.pop %v649
        %v651 = vmul.f32 %v453, %v648
        %v652 = vmul.f32 %v454, %v650
        %v653 = vadd.f32 %v651, %v645
        %v654 = vadd.f32 %v652, %v646
        %655 = vst [vmem:[%s418] sm:$0xff] %v653
        %656 = vst [vmem:[%s418 + $0x8] sm:$0xff] %v654
        %v657 = vld [vmem:[#allocation2] sm:$0x1]
        %v658 = vadd.f32 %v643, %v644
        %659 = vadd.xlane.f32.xlu0 %v658
        %v660 = vpop.xlane.xlu0 %659
        %v661 = vrot.slane %v660, 4
        %v662 = vadd.f32 %v660, %v661
        %v663 = vrot.slane %v662, 2
        %v664 = vadd.f32 %v662, %v663
        %v665 = vrot.slane %v664, 1
        %v666 = vadd.f32 %v664, %v665
        %s667 = vtos %v666
        %v668 = vstv %s667
        %v669 = vadd.f32 %v657, %v668
        %vm670 = vcmask 0
        %671 = vst.msk [vmem:[#allocation2] sm:$0x1] %vm670, %v669
        // Predicated region
        $region65: #{tpu_custom_call.1} parent=55 // pred_check
          %p672 = pneg %p447
        $region66: #{tpu_custom_call.1} parent=55 // pred_check_branch
          %674 = sbr.rel (%p672) target = $region68
        $region67: #{tpu_custom_call.1} parent=55 // pred_region
          %v675 = vld [vmem:[%s442] sm:$0x1]
          %v676 = vld [vmem:[#allocation2] sm:$0x1]
          %v677 = vadd.f32 %v675, %v676
          %678 = vst.msk [vmem:[%s446] sm:$0x1] %vm670, %v677
        $region68: #{tpu_custom_call.1} parent=55 // pred_fallthru
          _
        %s679 = sand.u32 %s254, 1
        %s680 = scalar_lea.sflag [#allocation5], %s679
        %s681 = sand.u32 %s254, 1
        %s682 = smul.addr %s681, 16
        %s683 = scalar_lea.vmem [#allocation6], %s682
        %p684 = scmp.lt.s32.totalorder %s30, 1
        %s685 = scalar_select %p684, %s30, 1
        %s686 = scalar_lea.vmem %s10, %s685
        // Predicated region
        $region69: #{tpu_custom_call.1} parent=55 // pred_check
          %p687 = pneg %p264
        $region70: #{tpu_custom_call.1} parent=55 // pred_check_branch
          %689 = sbr.rel (%p687) target = $region72
        $region71: #{tpu_custom_call.1} parent=55 // pred_region
          %s690 = smul.u32 2, %s31
          %s692 = ssub.s32 256, 256
          %693 = vsyncadd %s680, %s692
          %s694 = smul.addr %s30, 2
          %s695 = sadd.s32 %s690, %s694
          %s696 = smul.addr %s695, 128
          %s697 = scalar_lea.hbm %s9, %s696
          %s699 = sshll.u32 %s683, 4
          %s700 = int_to_ptr.vmem [resolvable:$true] %s699
          %702 = dma.vmem_to_hbm [thread:$0]  %s700, 256, %s697, %s680
        $region72: #{tpu_custom_call.1} parent=55 // pred_fallthru
          _
        // Predicated region
        $region73: #{tpu_custom_call.1} parent=55 // pred_check
          %p703 = pneg %p290
        $region74: #{tpu_custom_call.1} parent=55 // pred_check_branch
          %705 = sbr.rel (%p703) target = $region76
        $region75: #{tpu_custom_call.1} parent=55 // pred_region
          _
        $region76: #{tpu_custom_call.1} parent=55 // pred_fallthru
          _
      $region56: #{tpu_custom_call.1} parent=5 // pred_fallthru
        _
      %p706 = scmp.le.s32.totalorder 2, %s21
      // Predicated region
      $region77: #{tpu_custom_call.1} parent=5 // pred_check
        %p707 = pneg %p706
      $region78: #{tpu_custom_call.1} parent=5 // pred_check_branch
        %709 = sbr.rel (%p707) target = $region80
      $region79: #{tpu_custom_call.1} parent=5 // pred_region
        %s710 = ssub.s32 %s21, 2
        // Predicated region
        $region81: #{tpu_custom_call.1} parent=79 // pred_check
          %p711 = pneg %p270
        $region82: #{tpu_custom_call.1} parent=79 // pred_check_branch
          %713 = sbr.rel (%p711) target = $region84
        $region83: #{tpu_custom_call.1} parent=79 // pred_region
          %s714 = sand.u32 %s255, 1
          %s715 = scalar_lea.sflag [#allocation5], %s714
          %s716 = sand.u32 %s255, 1
          %s717 = smul.addr %s716, 16
          %s718 = scalar_lea.vmem [#allocation6], %s717
          %719 = dma.done %s715, 256
        $region84: #{tpu_custom_call.1} parent=79 // pred_fallthru
          _
        // Predicated region
        $region85: #{tpu_custom_call.1} parent=79 // pred_check
          %p720 = pneg %p296
        $region86: #{tpu_custom_call.1} parent=79 // pred_check_branch
          %722 = sbr.rel (%p720) target = $region88
        $region87: #{tpu_custom_call.1} parent=79 // pred_region
          %p723 = scmp.lt.s32.totalorder %s32, 1
          %s724 = scalar_select %p723, %s32, 1
          %s725 = scalar_lea.vmem %s10, %s724
        $region88: #{tpu_custom_call.1} parent=79 // pred_fallthru
          _
      $region80: #{tpu_custom_call.1} parent=5 // pred_fallthru
        _
    $region6: #{tpu_custom_call.1} parent=1 // loop_footer
      %s25 = sadd.s32 1, %s21
    $region7: #{tpu_custom_call.1} parent=1 // loop_footer_branch
      %20 = sbr.rel target = $region3
    $region8: #{tpu_custom_call.1} parent=1 // loop_exit
      _
    %726 = vsyncpa [#allocation4], 1
    %s727 = scalar_lea.sflag [#allocation4], 1
    %728 = vsyncpa %s727, 1
    %729 = vsyncpa [#allocation5], 1
    %s730 = scalar_lea.sflag [#allocation5], 1
    %731 = vsyncpa %s730, 1

</llo_original>
